<compile_context>
chip_gen: v5e
topology: v5e:2x2
jax: 0.10.0
libtpu: 0.0.40
codegen_flags: <defaults>
</compile_context>

<pallas_src>
import numpy as np
import jax
import jax.numpy as jnp
from jax.experimental import pallas as pl
from jax.experimental.pallas import tpu as pltpu

_HALF_PI = float(np.pi / 2.0)


def _nyquist_scale(h: int, w: int) -> np.ndarray:
    """(1, H*W) per-pixel scale: 0.5 on the Nyquist row/col (0.25 at their
    crossing), 1 elsewhere.  Applied to both Mag and Pha before cos/sin —
    identical to the reference, which scales the placed spectrum before
    cos/sin (both placed copies of the Nyquist row/col come from the same
    compact pixel)."""
    rs = np.ones((h,), np.float32)
    cs = np.ones((w,), np.float32)
    if h % 2 == 0:
        rs[h // 2] = 0.5
    if w % 2 == 0:
        cs[w // 2] = 0.5
    return np.outer(rs, cs).reshape(1, h * w).astype(np.float32)


def _vmem_config():
    """(vmem_limit_bytes, tile_budget_bytes) sized for the local TPU generation."""
    cap = 64 * 1024 * 1024  # conservative default = v7x physical VMEM
    try:
        cap = int(getattr(pltpu.get_tpu_info(), "vmem_capacity_bytes", cap))
    except Exception:
        pass
    vmem_limit = min((cap * 3) // 4, 100 * 1024 * 1024)
    return int(vmem_limit), int(vmem_limit // 2)


def _pick_lane_tile(hw: int, c2: int, tile_budget_bytes: int) -> int:
    """Largest multiple-of-128 lane tile that divides H*W and fits the budget."""
    bytes_per_lane = 2 * 2 * c2 * 4        # (input + output) block, double-buffered, f32
    max_tile = (tile_budget_bytes // bytes_per_lane) // 128 * 128
    max_tile = max(max_tile, 128)
    if hw <= max_tile:
        return hw
    t = max_tile
    while t >= 128:
        if hw % t == 0:
            return t
        t -= 128
    # TODO(synk): H*W has no multiple-of-128 divisor under budget; fall back to one tile.
    return hw


# ---------------------------------------------------------------------------
# Kernels.  Input block x_ref is (1, 2C, T) = [mag ; pha] stacked on channels.
# Output block is (1, 2C, T) = [real ; imag] stacked on channels.
# ---------------------------------------------------------------------------

def _fuse_kernel_packed(x_ref, w1_ref, w2m_ref, w2p_ref, scale_ref, out_ref):
    """Path for C % 8 != 0: second-stage weights duplicate the Mag/Pha rows so
    the single cos() (the EUP-bound op) runs on a full-sublane (2C, T) array."""
    v = x_ref[0]                                    # (2C, T)
    scale = scale_ref[...]                          # (1, T) Nyquist fold

    t = jnp.dot(w1_ref[...], v, preferred_element_type=jnp.float32)
    t = jnp.maximum(t, 0.1 * t)                     # LeakyReLU(0.1)

    mag2 = jnp.dot(w2m_ref[...], t, preferred_element_type=jnp.float32) * scale  # [Mag; Mag]
    pha2 = jnp.dot(w2p_ref[...], t, preferred_element_type=jnp.float32) * scale  # [Pha; Pha]

    c2 = pha2.shape[0]
    row = jax.lax.broadcasted_iota(jnp.int32, (c2, 1), 0)
    off = jnp.where(row >= c2 // 2, _HALF_PI, 0.0).astype(jnp.float32)
    # rows 0:C -> Mag*cos(Pha) (real), rows C:2C -> Mag*cos(Pha - pi/2) = Mag*sin(Pha) (imag)
    out_ref[0] = (mag2 * jnp.cos(pha2 - off)).astype(out_ref.dtype)


def _fuse_kernel_aligned(x_ref, w1_ref, w2_ref, scale_ref, out_ref):
    """Path for C % 8 == 0: plain block-diagonal second stage; cos/sin on
    already sublane-aligned (C, T) arrays."""
    v = x_ref[0]                                    # (2C, T)
    scale = scale_ref[...]                          # (1, T)

    t = jnp.dot(w1_ref[...], v, preferred_element_type=jnp.float32)
    t = jnp.maximum(t, 0.1 * t)                     # LeakyReLU(0.1)
    m = jnp.dot(w2_ref[...], t, preferred_element_type=jnp.float32) * scale

    c = m.shape[0] // 2
    mag_s = m[:c]
    pha_s = m[c:]
    out_ref[0, :c] = (mag_s * jnp.cos(pha_s)).astype(out_ref.dtype)
    out_ref[0, c:] = (mag_s * jnp.sin(pha_s)).astype(out_ref.dtype)


# ---------------------------------------------------------------------------
# Wrapper.
# ---------------------------------------------------------------------------

def _corner_place(q, h: int, w: int):
    """Corner placement into the (2H, 2W) spectrum via concatenation of the
    four quadrant slices (no zeros+scatter round trips)."""
    n, c, _, _ = q.shape
    ir1, ir2 = ((h // 2 + 1, h // 2 + 1) if h % 2 == 1 else (h // 2 + 1, h // 2))
    ic1, ic2 = ((w // 2 + 1, w // 2 + 1) if w % 2 == 1 else (w // 2 + 1, w // 2))
    mid_w = (ic2 + w) - ic1
    mid_h = (ir2 + h) - ir1

    top = jnp.concatenate(
        [q[:, :, :ir1, :ic1], jnp.zeros((n, c, ir1, mid_w), q.dtype), q[:, :, :ir1, ic2:]],
        axis=3)
    bot = jnp.concatenate(
        [q[:, :, ir2:, :ic1], jnp.zeros((n, c, h - ir2, mid_w), q.dtype), q[:, :, ir2:, ic2:]],
        axis=3)
    mid = jnp.zeros((n, c, mid_h, 2 * w), q.dtype)
    return jnp.concatenate([top, mid, bot], axis=2)


def freup_corner_interpolation(x, w1a, w2a, w1p, w2p):
    """JAX/Pallas equivalent of freup_Cornerdinterpolation.forward; x is NCHW f32."""
    N, C, H, W = x.shape
    HW = H * W
    C2 = 2 * C

    # --- XLA glue: FFT + mag/phase ---------------------------------------
    Fx = jnp.fft.fft2(x)
    mag = jnp.abs(Fx).astype(jnp.float32)
    pha = jnp.angle(Fx).astype(jnp.float32)
    stacked = jnp.concatenate([mag, pha], axis=1).reshape(N, C2, HW)   # [mag; pha]

    # --- fused block-diagonal weights -------------------------------------
    z = jnp.zeros((C, C), jnp.float32)
    wd1 = jnp.concatenate(
        [jnp.concatenate([w1a, z], axis=1), jnp.concatenate([z, w1p], axis=1)], axis=0)
    if C % 8 == 0:
        wd2 = jnp.concatenate(
            [jnp.concatenate([w2a, z], axis=1), jnp.concatenate([z, w2p], axis=1)], axis=0)
        kernel = _fuse_kernel_aligned
        weight_ops = (wd1, wd2)
    else:
        # Duplicated second-stage rows -> dense-EUP packed kernel.
        w2m_d = jnp.concatenate([jnp.concatenate([w2a, z], axis=1)] * 2, axis=0)  # [[w2a,0],[w2a,0]]
        w2p_d = jnp.concatenate([jnp.concatenate([z, w2p], axis=1)] * 2, axis=0)  # [[0,w2p],[0,w2p]]
        kernel = _fuse_kernel_packed
        weight_ops = (wd1, w2m_d, w2p_d)

    scale = jnp.asarray(_nyquist_scale(H, W))                          # (1, HW)

    # --- lane tiling / VMEM budget (generation aware) ---------------------
    vmem_limit, tile_budget = _vmem_config()
    T = _pick_lane_tile(HW, C2, tile_budget)
    grid = (N, HW // T)

    wspec = pl.BlockSpec((C2, C2), lambda n, j: (0, 0))
    in_specs = ([pl.BlockSpec((1, C2, T), lambda n, j: (n, 0, j))]
                + [wspec] * len(weight_ops)
                + [pl.BlockSpec((1, T), lambda n, j: (0, j))])
    out_specs = pl.BlockSpec((1, C2, T), lambda n, j: (n, 0, j))

    n_mm = len(weight_ops)
    cost = pl.CostEstimate(
        flops=2 * n_mm * (C2 ** 2) * HW * N,
        transcendentals=C2 * HW * N,
        bytes_accessed=4 * (2 * N * C2 * HW + n_mm * C2 * C2 + HW),
    )

    out = pl.pallas_call(
        kernel,
        out_shape=jax.ShapeDtypeStruct((N, C2, HW), jnp.float32),
        grid=grid,
        in_specs=in_specs,
        out_specs=out_specs,
        compiler_params=pltpu.CompilerParams(
            dimension_semantics=("parallel", "parallel"),
            vmem_limit_bytes=vmem_limit),
        cost_estimate=cost,
    )(stacked, *weight_ops, scale)

    re_c = out[:, :C].reshape(N, C, H, W)
    im_c = out[:, C:].reshape(N, C, H, W)

    # --- XLA glue: corner placement + inverse FFT -------------------------
    spec_up = _corner_place(jax.lax.complex(re_c, im_c), H, W)
    return jnp.abs(jnp.fft.ifft2(spec_up))


# ---------------------------------------------------------------------------
# Pure-JAX reference mirroring the PyTorch module exactly (for verification).
# ---------------------------------------------------------------------------

def reference_forward(x, w1a, w2a, w1p, w2p):
    N, C, H, W = x.shape
    Fx = jnp.fft.fft2(x)
    mag = jnp.abs(Fx)
    pha = jnp.angle(Fx)

    def conv_stack(v, w1, w2):
        t = jnp.einsum('oc,nchw->nohw', w1, v, precision=jax.lax.Precision.HIGHEST)
        t = jnp.where(t >= 0, t, 0.1 * t)
        return jnp.einsum('oc,nchw->nohw', w2, t, precision=jax.lax.Precision.HIGHEST)

    Mag = conv_stack(mag, w1a, w2a)
    Pha = conv_stack(pha, w1p, w2p)
    r, c = H, W
    ir1, ir2 = ((r // 2 + 1, r // 2 + 1) if r % 2 == 1 else (r // 2 + 1, r // 2))
    ic1, ic2 = ((c // 2 + 1, c // 2 + 1) if c % 2 == 1 else (c // 2 + 1, c // 2))

    def place(M):
        I = jnp.zeros((N, C, 2 * r, 2 * c), jnp.float32)
        I = I.at[:, :, :ir1, :ic1].set(M[:, :, :ir1, :ic1])
        I = I.at[:, :, :ir1, ic2 + c:].set(M[:, :, :ir1, ic2:])
        I = I.at[:, :, ir2 + r:, :ic1].set(M[:, :, ir2:, :ic1])
        I = I.at[:, :, ir2 + r:, ic2 + c:].set(M[:, :, ir2:, ic2:])
        if r % 2 == 0:
            I = I.at[:, :, ir2, :].multiply(0.5)
            I = I.at[:, :, ir2 + r, :].multiply(0.5)
        if c % 2 == 0:
            I = I.at[:, :, :, ic2].multiply(0.5)
            I = I.at[:, :, :, ic2 + c].multiply(0.5)
        return I

    IM = place(Mag)
    IP = place(Pha)
    spec = jax.lax.complex(IM * jnp.cos(IP), IM * jnp.sin(IP))
    return jnp.abs(jnp.fft.ifft2(spec))


if __name__ == "__main__":
    key = jax.random.PRNGKey(0)

    def make_case(k, n, c, h, w):
        kx, k1, k2, k3, k4 = jax.random.split(k, 5)
        x = jax.random.normal(kx, (n, c, h, w), dtype=jnp.float32)
        bound = 1.0 / np.sqrt(c)
        mk = lambda kk: jax.random.uniform(kk, (c, c), jnp.float32, -bound, bound)
        return x, mk(k1), mk(k2), mk(k3), mk(k4)

    k0, k1 = jax.random.split(key)

    # Primary case (module demo shape) — exercises the packed (C % 8 != 0) path.
    x, w1a, w2a, w1p, w2p = make_case(k0, 2, 4, 16, 16)
    out = jax.block_until_ready(freup_corner_interpolation(x, w1a, w2a, w1p, w2p))
    ref = jax.block_until_ready(reference_forward(x, w1a, w2a, w1p, w2p))
    assert out.shape == (2, 4, 32, 32), out.shape
    err = float(jnp.max(jnp.abs(out - ref)) / (jnp.max(jnp.abs(ref)) + 1e-6))
    assert err < 1e-2, f"packed path mismatch vs reference: rel-max-err={err}"

    # Secondary case — exercises the sublane-aligned (C % 8 == 0) path.
    x2, a1, a2, p1, p2 = make_case(k1, 1, 8, 16, 16)
    out2 = jax.block_until_ready(freup_corner_interpolation(x2, a1, a2, p1, p2))
    ref2 = jax.block_until_ready(reference_forward(x2, a1, a2, p1, p2))
    assert out2.shape == (1, 8, 32, 32), out2.shape
    err2 = float(jnp.max(jnp.abs(out2 - ref2)) / (jnp.max(jnp.abs(ref2)) + 1e-6))
    assert err2 < 1e-2, f"aligned path mismatch vs reference: rel-max-err={err2}"

    print("KERNEL_OK")
</pallas_src>

<mosaic_0001>
module attributes {stable_mosaic.version = 11 : i64} {
  func.func @_fuse_kernel_packed(%arg0: i32, %arg1: i32, %arg2: memref<1x8x256xf32, #tpu.memory_space<vmem>>, %arg3: memref<8x8xf32, #tpu.memory_space<vmem>>, %arg4: memref<8x8xf32, #tpu.memory_space<vmem>>, %arg5: memref<8x8xf32, #tpu.memory_space<vmem>>, %arg6: memref<1x256xf32, #tpu.memory_space<vmem>>, %arg7: memref<1x8x256xf32, #tpu.memory_space<vmem>>) attributes {dimension_semantics = [#tpu.dimension_semantics<parallel>, #tpu.dimension_semantics<parallel>], iteration_bounds = array<i64: 2, 1>, scalar_prefetch = 0 : i64, scratch_operands = 0 : i64, tpu.core_type = #tpu.core_type<tc>, window_params = [{transform_indices = @transform_0, window_bounds = array<i64: 1, 8, 256>}, {pipeline_mode = #tpu.pipeline_mode<synchronous>, transform_indices = @transform_1, window_bounds = array<i64: 8, 8>}, {pipeline_mode = #tpu.pipeline_mode<synchronous>, transform_indices = @transform_2, window_bounds = array<i64: 8, 8>}, {pipeline_mode = #tpu.pipeline_mode<synchronous>, transform_indices = @transform_3, window_bounds = array<i64: 8, 8>}, {transform_indices = @transform_4, window_bounds = array<i64: 1, 256>}, {transform_indices = @transform_5, window_bounds = array<i64: 1, 8, 256>}]} {
    %c0 = arith.constant 0 : index
    %c0_0 = arith.constant 0 : index
    %c0_1 = arith.constant 0 : index
    %0 = vector.load %arg2[%c0, %c0_0, %c0_1] : memref<1x8x256xf32, #tpu.memory_space<vmem>>, vector<1x8x256xf32>
    %1 = vector.shape_cast %0 : vector<1x8x256xf32> to vector<8x256xf32>
    %c0_2 = arith.constant 0 : index
    %c0_3 = arith.constant 0 : index
    %2 = vector.load %arg6[%c0_2, %c0_3] : memref<1x256xf32, #tpu.memory_space<vmem>>, vector<1x256xf32>
    %c0_4 = arith.constant 0 : index
    %c0_5 = arith.constant 0 : index
    %3 = vector.load %arg3[%c0_4, %c0_5] : memref<8x8xf32, #tpu.memory_space<vmem>>, vector<8x8xf32>
    %cst = arith.constant dense<0.000000e+00> : vector<8x256xf32>
    %4 = tpu.matmul %3, %1, %cst {dimension_numbers = #tpu.dot_dimension_numbers<[1], [0], [0], [1], [0, 0, 1, 1], [], []>} : vector<8x8xf32>, vector<8x256xf32>, vector<8x256xf32> -> vector<8x256xf32>
    %cst_6 = arith.constant 1.000000e-01 : f32
    %5 = vector.broadcast %cst_6 : f32 to vector<8x256xf32>
    %6 = arith.mulf %5, %4 : vector<8x256xf32>
    %7 = arith.maximumf %4, %6 : vector<8x256xf32>
    %c0_7 = arith.constant 0 : index
    %c0_8 = arith.constant 0 : index
    %8 = vector.load %arg4[%c0_7, %c0_8] : memref<8x8xf32, #tpu.memory_space<vmem>>, vector<8x8xf32>
    %cst_9 = arith.constant dense<0.000000e+00> : vector<8x256xf32>
    %9 = tpu.matmul %8, %7, %cst_9 {dimension_numbers = #tpu.dot_dimension_numbers<[1], [0], [0], [1], [0, 0, 1, 1], [], []>} : vector<8x8xf32>, vector<8x256xf32>, vector<8x256xf32> -> vector<8x256xf32>
    %10 = vector.broadcast %2 : vector<1x256xf32> to vector<8x256xf32>
    %11 = arith.mulf %9, %10 : vector<8x256xf32>
    %c0_10 = arith.constant 0 : index
    %c0_11 = arith.constant 0 : index
    %12 = vector.load %arg5[%c0_10, %c0_11] : memref<8x8xf32, #tpu.memory_space<vmem>>, vector<8x8xf32>
    %cst_12 = arith.constant dense<0.000000e+00> : vector<8x256xf32>
    %13 = tpu.matmul %12, %7, %cst_12 {dimension_numbers = #tpu.dot_dimension_numbers<[1], [0], [0], [1], [0, 0, 1, 1], [], []>} : vector<8x8xf32>, vector<8x256xf32>, vector<8x256xf32> -> vector<8x256xf32>
    %14 = vector.broadcast %2 : vector<1x256xf32> to vector<8x256xf32>
    %15 = arith.mulf %13, %14 : vector<8x256xf32>
    %16 = tpu.iota {dimensions = array<i32: 0>} : vector<8x1xi32>
    %c4_i32 = arith.constant 4 : i32
    %17 = vector.broadcast %c4_i32 : i32 to vector<8x1xi32>
    %18 = arith.cmpi sge, %16, %17 : vector<8x1xi32>
    %cst_13 = arith.constant 1.57079637 : f32
    %cst_14 = arith.constant 0.000000e+00 : f32
    %19 = vector.broadcast %cst_13 : f32 to vector<8x1xf32>
    %20 = vector.broadcast %cst_14 : f32 to vector<8x1xf32>
    %21 = arith.select %18, %19, %20 : vector<8x1xi1>, vector<8x1xf32>
    %22 = vector.broadcast %21 : vector<8x1xf32> to vector<8x256xf32>
    %23 = arith.subf %15, %22 : vector<8x256xf32>
    %24 = math.cos %23 : vector<8x256xf32>
    %25 = arith.mulf %11, %24 : vector<8x256xf32>
    %c0_15 = arith.constant 0 : index
    %c0_16 = arith.constant 0 : index
    %c0_17 = arith.constant 0 : index
    %26 = vector.load %arg7[%c0_15, %c0_16, %c0_17] : memref<1x8x256xf32, #tpu.memory_space<vmem>>, vector<1x8x256xf32>
    %27 = vector.shape_cast %26 : vector<1x8x256xf32> to vector<8x256xf32>
    %28 = vector.shape_cast %25 : vector<8x256xf32> to vector<1x8x256xf32>
    tpu.vector_store %arg7[%c0_15, %c0_16, %c0_17], %28 {strides = array<i32>} : memref<1x8x256xf32, #tpu.memory_space<vmem>>, vector<1x8x256xf32>,
    return
  }
  func.func @transform_0(%arg0: i32, %arg1: i32) -> (i32, i32, i32) {
    %c0_i32 = arith.constant 0 : i32
    %c0_i32_0 = arith.constant 0 : i32
    return %arg0, %c0_i32, %arg1 : i32, i32, i32
  }
  func.func @transform_1(%arg0: i32, %arg1: i32) -> (i32, i32) {
    %c0_i32 = arith.constant 0 : i32
    %c0_i32_0 = arith.constant 0 : i32
    %c0_i32_1 = arith.constant 0 : i32
    return %c0_i32, %c0_i32_0 : i32, i32
  }
  func.func @transform_2(%arg0: i32, %arg1: i32) -> (i32, i32) {
    %c0_i32 = arith.constant 0 : i32
    %c0_i32_0 = arith.constant 0 : i32
    %c0_i32_1 = arith.constant 0 : i32
    return %c0_i32, %c0_i32_0 : i32, i32
  }
  func.func @transform_3(%arg0: i32, %arg1: i32) -> (i32, i32) {
    %c0_i32 = arith.constant 0 : i32
    %c0_i32_0 = arith.constant 0 : i32
    %c0_i32_1 = arith.constant 0 : i32
    return %c0_i32, %c0_i32_0 : i32, i32
  }
  func.func @transform_4(%arg0: i32, %arg1: i32) -> (i32, i32) {
    %c0_i32 = arith.constant 0 : i32
    %c0_i32_0 = arith.constant 0 : i32
    return %c0_i32, %arg1 : i32, i32
  }
  func.func @transform_5(%arg0: i32, %arg1: i32) -> (i32, i32, i32) {
    %c0_i32 = arith.constant 0 : i32
    %c0_i32_0 = arith.constant 0 : i32
    return %arg0, %c0_i32, %arg1 : i32, i32, i32
  }
}

</mosaic_0001>

<llo_original>
// kernel: tpu_custom_call.1
$region0: #{tpu_custom_call.1}
  #allocation0 [shape = 'u32[]', space=smem, size = 0x4, offset = 0x4, fixed_abs, tag = 'smem constant byte address 0x4 - core index']
  #allocation1 [shape = 'u32[72,128]{1,0:T(1,128)}', space=vmem, size = 0x9000, scoped, tag = 'internal scratch']
  %s0 = inlined_call_operand.hbm [shape: f32[2,8,256], index: 0, kind: input, shape index: {}]
  %s1 = inlined_call_operand.hbm [shape: f32[8,8], index: 1, kind: input, shape index: {}]
  %s2 = inlined_call_operand.hbm [shape: f32[8,8], index: 2, kind: input, shape index: {}]
  %s3 = inlined_call_operand.hbm [shape: f32[8,8], index: 3, kind: input, shape index: {}]
  %s4 = inlined_call_operand.vmem [shape: f32[1,256], index: 4, kind: input, shape index: {}]
  %s5 = inlined_call_operand.hbm [shape: f32[2,8,256], index: 5, kind: output, shape index: {}]
  %s6 = sld [smem:[#allocation0]]
  $region69: #{tpu_custom_call.1} parent=0
    _
  %s8 = ssub.s32 1, %s6
  %s9 = scalar_select 0, %s8, %s6
  $region1: #{tpu_custom_call.1} parent=0
    #allocation2 [shape = 'u8[16384]{0}', space=vmem, size = 0x4000, scoped, tag = 'input window, operand 0']
    #allocation3 [shape = 's32[2]{0}', space=sflag, size = 0x8, scoped, tag = 'scoped memory for tpu_custom_call.1']
    #allocation4 [shape = 's32[2]{0}', space=sflag, size = 0x8, scoped, tag = 'scoped memory for tpu_custom_call.1']
    #allocation5 [shape = 'u8[4096]{0}', space=vmem, size = 0x1000, scoped, tag = 'input window, operand 1, single buffered']
    #allocation6 [shape = 's32[1]{0}', space=sflag, size = 0x4, scoped, tag = 'scoped memory for tpu_custom_call.1']
    #allocation7 [shape = 'u8[4096]{0}', space=vmem, size = 0x1000, scoped, tag = 'input window, operand 2, single buffered']
    #allocation8 [shape = 'u8[4096]{0}', space=vmem, size = 0x1000, scoped, tag = 'input window, operand 3, single buffered']
    #allocation9 [shape = 's32[1]{0}', space=sflag, size = 0x4, scoped, tag = 'scoped memory for tpu_custom_call.1']
    #allocation10 [shape = 'u8[16384]{0}', space=vmem, size = 0x4000, scoped, tag = 'output window, operand 0']
    %10 = vsyncpa [#allocation3], 0
    %s11 = scalar_lea.sflag [#allocation3], 1
    %12 = vsyncpa %s11, 0
    %13 = vsyncpa [#allocation6], 0
    %14 = vsyncpa [#allocation9], 0
    %15 = vsyncpa [#allocation4], 0
    %s16 = scalar_lea.sflag [#allocation4], 1
    %17 = vsyncpa %s16, 0
    loop: start=0, step=1, limit=4
    $region2: #{tpu_custom_call.1} parent=1 // loop_pre_header
      _
    $region3: #{tpu_custom_call.1} parent=1 // loop_header
      %s19 = sphi 0, %s23
      %p20 = scmp.ge.s32.totalorder %s19, 4
      %s26 = sphi 0, %s38
      %s27 = sphi 0, %s34
      %s28 = sphi 0, %s26
      %s29 = sphi 0, %s27
      %s30 = sphi 0, %s28
      %s31 = sphi 0, %s29
      %s43 = sphi 0, %s45
      %s46 = sphi 0, %s43
      %s47 = sphi 0, %s46
      %s63 = sphi 0, %s47
      %s67 = sphi 0, %s67
      %s69 = sphi 0, %s67
      %s70 = sphi 0, %s69
      %s84 = sphi 0, %s70
      %s88 = sphi 0, %s88
      %s90 = sphi 0, %s88
      %s91 = sphi 0, %s90
      %s105 = sphi 0, %s91
      %s109 = sphi 0, %s109
      %s111 = sphi 0, %s109
      %s112 = sphi 0, %s111
      %s126 = sphi 0, %s112
      %s132 = sphi 0, %s134
      %s135 = sphi 0, %s132
      %s136 = sphi 0, %s135
      %s152 = sphi 0, %s136
      %s160 = sphi 0, %s162
      %s163 = sphi 0, %s160
      %s164 = sphi 0, %s163
      %s180 = sphi 0, %s164
    $region4: #{tpu_custom_call.1} parent=1 // loop_header_branch
      %22 = sbr.rel (%p20) target = $region8
    $region5: #{tpu_custom_call.1} parent=1 // loop_body
      %s24 = ssub.s32 %s19, 1
      %s25 = ssub.s32 %s19, 2
      %s32 = sadd.s32 1, %s27
      %p33 = scmp.ge.s32.totalorder %s32, 1
      %s34 = scalar_select %p33, 0, %s32
      %s35 = sadd.s32 1, %s26
      %s36 = scalar_select %p33, %s35, %s26
      %p37 = scmp.ge.s32.totalorder %s36, 2
      %s38 = scalar_select %p37, 0, %s36
      %s39 = ssub.s32 %s26, %s38
      %s40 = ssub.s32 %s27, %s34
      %s41 = sor.u32 %s39, %s40
      %p42 = scmp.eq.s32.totalorder %s41, 0
      %s44 = sadd.s32 %s43, 1
      %s45 = scalar_select %p42, %s43, %s44
      %p48 = pneg %p42
      %p49 = scmp.eq.s32.totalorder %s19, 1
      %p50 = por %p48, %p49
      %p51 = scmp.ne.s32.totalorder %s43, %s46
      %p52 = scmp.eq.s32.totalorder %s19, 0
      %p53 = por %p51, %p52
      %p54 = scmp.ne.s32.totalorder %s43, %s46
      %p55 = scmp.eq.s32.totalorder %s24, 1
      %p56 = por %p54, %p55
      %p57 = scmp.ne.s32.totalorder %s46, %s47
      %p58 = scmp.eq.s32.totalorder %s24, 0
      %p59 = por %p57, %p58
      %p60 = scmp.ne.s32.totalorder %s46, %s47
      %p61 = scmp.eq.s32.totalorder %s25, 1
      %p62 = por %p60, %p61
      %p64 = scmp.ne.s32.totalorder %s47, %s63
      %p65 = scmp.eq.s32.totalorder %s25, 0
      %p66 = por %p64, %p65
      %s68 = sadd.s32 %s67, 1
      %p71 = scmp.eq.s32.totalorder %s19, 1
      %p72 = scmp.ne.s32.totalorder %s67, %s69
      %p73 = scmp.eq.s32.totalorder %s19, 0
      %p74 = por %p72, %p73
      %p75 = scmp.ne.s32.totalorder %s67, %s69
      %p76 = scmp.eq.s32.totalorder %s24, 1
      %p77 = por %p75, %p76
      %p78 = scmp.ne.s32.totalorder %s69, %s70
      %p79 = scmp.eq.s32.totalorder %s24, 0
      %p80 = por %p78, %p79
      %p81 = scmp.ne.s32.totalorder %s69, %s70
      %p82 = scmp.eq.s32.totalorder %s25, 1
      %p83 = por %p81, %p82
      %p85 = scmp.ne.s32.totalorder %s70, %s84
      %p86 = scmp.eq.s32.totalorder %s25, 0
      %p87 = por %p85, %p86
      %s89 = sadd.s32 %s88, 1
      %p92 = scmp.eq.s32.totalorder %s19, 1
      %p93 = scmp.ne.s32.totalorder %s88, %s90
      %p94 = scmp.eq.s32.totalorder %s19, 0
      %p95 = por %p93, %p94
      %p96 = scmp.ne.s32.totalorder %s88, %s90
      %p97 = scmp.eq.s32.totalorder %s24, 1
      %p98 = por %p96, %p97
      %p99 = scmp.ne.s32.totalorder %s90, %s91
      %p100 = scmp.eq.s32.totalorder %s24, 0
      %p101 = por %p99, %p100
      %p102 = scmp.ne.s32.totalorder %s90, %s91
      %p103 = scmp.eq.s32.totalorder %s25, 1
      %p104 = por %p102, %p103
      %p106 = scmp.ne.s32.totalorder %s91, %s105
      %p107 = scmp.eq.s32.totalorder %s25, 0
      %p108 = por %p106, %p107
      %s110 = sadd.s32 %s109, 1
      %p113 = scmp.eq.s32.totalorder %s19, 1
      %p114 = scmp.ne.s32.totalorder %s109, %s111
      %p115 = scmp.eq.s32.totalorder %s19, 0
      %p116 = por %p114, %p115
      %p117 = scmp.ne.s32.totalorder %s109, %s111
      %p118 = scmp.eq.s32.totalorder %s24, 1
      %p119 = por %p117, %p118
      %p120 = scmp.ne.s32.totalorder %s111, %s112
      %p121 = scmp.eq.s32.totalorder %s24, 0
      %p122 = por %p120, %p121
      %p123 = scmp.ne.s32.totalorder %s111, %s112
      %p124 = scmp.eq.s32.totalorder %s25, 1
      %p125 = por %p123, %p124
      %p127 = scmp.ne.s32.totalorder %s112, %s126
      %p128 = scmp.eq.s32.totalorder %s25, 0
      %p129 = por %p127, %p128
      %s130 = ssub.s32 %s27, %s34
      %p131 = scmp.eq.s32.totalorder %s130, 0
      %s133 = sadd.s32 %s132, 1
      %s134 = scalar_select %p131, %s132, %s133
      %p137 = pneg %p131
      %p138 = scmp.eq.s32.totalorder %s19, 1
      %p139 = por %p137, %p138
      %p140 = scmp.ne.s32.totalorder %s132, %s135
      %p141 = scmp.eq.s32.totalorder %s19, 0
      %p142 = por %p140, %p141
      %p143 = scmp.ne.s32.totalorder %s132, %s135
      %p144 = scmp.eq.s32.totalorder %s24, 1
      %p145 = por %p143, %p144
      %p146 = scmp.ne.s32.totalorder %s135, %s136
      %p147 = scmp.eq.s32.totalorder %s24, 0
      %p148 = por %p146, %p147
      %p149 = scmp.ne.s32.totalorder %s135, %s136
      %p150 = scmp.eq.s32.totalorder %s25, 1
      %p151 = por %p149, %p150
      %p153 = scmp.ne.s32.totalorder %s136, %s152
      %p154 = scmp.eq.s32.totalorder %s25, 0
      %p155 = por %p153, %p154
      %s156 = ssub.s32 %s26, %s38
      %s157 = ssub.s32 %s27, %s34
      %s158 = sor.u32 %s156, %s157
      %p159 = scmp.eq.s32.totalorder %s158, 0
      %s161 = sadd.s32 %s160, 1
      %s162 = scalar_select %p159, %s160, %s161
      %p165 = pneg %p159
      %p166 = scmp.eq.s32.totalorder %s19, 1
      %p167 = por %p165, %p166
      %p168 = scmp.ne.s32.totalorder %s160, %s163
      %p169 = scmp.eq.s32.totalorder %s19, 0
      %p170 = por %p168, %p169
      %p171 = scmp.ne.s32.totalorder %s160, %s163
      %p172 = scmp.eq.s32.totalorder %s24, 1
      %p173 = por %p171, %p172
      %p174 = scmp.ne.s32.totalorder %s163, %s164
      %p175 = scmp.eq.s32.totalorder %s24, 0
      %p176 = por %p174, %p175
      %p177 = scmp.ne.s32.totalorder %s163, %s164
      %p178 = scmp.eq.s32.totalorder %s25, 1
      %p179 = por %p177, %p178
      %p181 = scmp.ne.s32.totalorder %s164, %s180
      %p182 = scmp.eq.s32.totalorder %s25, 0
      %p183 = por %p181, %p182
      %p184 = scmp.le.s32.totalorder 1, %s19
      %p185 = scmp.lt.s32.totalorder %s19, 3
      %p186 = pnand %p184, %p185
      %p187 = pneg %p186
      // Predicated region
      $region9: #{tpu_custom_call.1} parent=5 // pred_check
        _
      $region10: #{tpu_custom_call.1} parent=5 // pred_check_branch
        %189 = sbr.rel (%p186) target = $region12
      $region11: #{tpu_custom_call.1} parent=5 // pred_region
        %s190 = ssub.s32 %s19, 1
        // Predicated region
        $region13: #{tpu_custom_call.1} parent=11 // pred_check
          %p191 = pneg %p80
        $region14: #{tpu_custom_call.1} parent=11 // pred_check_branch
          %193 = sbr.rel (%p191) target = $region16
        $region15: #{tpu_custom_call.1} parent=11 // pred_region
          %195 = vsyncadd [#allocation6], 0
          %s197 = sshll.u32 %s1, 4
          %s198 = int_to_ptr.hbm [resolvable:$true] %s197
          %s199 = sshll.u32 [#allocation5], 4
          %s200 = int_to_ptr.vmem [resolvable:$true] %s199
          %202 = dma.hbm_to_vmem [thread:$0]  %s198, 128, %s200, [#allocation6]
        $region16: #{tpu_custom_call.1} parent=11 // pred_fallthru
          _
        // Predicated region
        $region17: #{tpu_custom_call.1} parent=11 // pred_check
          %p203 = pneg %p101
        $region18: #{tpu_custom_call.1} parent=11 // pred_check_branch
          %205 = sbr.rel (%p203) target = $region20
        $region19: #{tpu_custom_call.1} parent=11 // pred_region
          %207 = vsyncadd [#allocation6], 0
          %s209 = sshll.u32 %s2, 4
          %s210 = int_to_ptr.hbm [resolvable:$true] %s209
          %s211 = sshll.u32 [#allocation7], 4
          %s212 = int_to_ptr.vmem [resolvable:$true] %s211
          %214 = dma.hbm_to_vmem [thread:$0]  %s210, 128, %s212, [#allocation6]
        $region20: #{tpu_custom_call.1} parent=11 // pred_fallthru
          _
        // Predicated region
        $region21: #{tpu_custom_call.1} parent=11 // pred_check
          %p215 = pneg %p122
        $region22: #{tpu_custom_call.1} parent=11 // pred_check_branch
          %217 = sbr.rel (%p215) target = $region24
        $region23: #{tpu_custom_call.1} parent=11 // pred_region
          %219 = vsyncadd [#allocation9], 0
          %s221 = sshll.u32 %s3, 4
          %s222 = int_to_ptr.hbm [resolvable:$true] %s221
          %s223 = sshll.u32 [#allocation8], 4
          %s224 = int_to_ptr.vmem [resolvable:$true] %s223
          %226 = dma.hbm_to_vmem [thread:$0]  %s222, 128, %s224, [#allocation9]
        $region24: #{tpu_custom_call.1} parent=11 // pred_fallthru
          _
        // Predicated region
        $region25: #{tpu_custom_call.1} parent=11 // pred_check
          %p227 = pneg %p148
        $region26: #{tpu_custom_call.1} parent=11 // pred_check_branch
          %229 = sbr.rel (%p227) target = $region28
        $region27: #{tpu_custom_call.1} parent=11 // pred_region
          %s230 = smul.u32 2, %s29
          %p231 = scmp.lt.s32.totalorder %s230, 1
          %s232 = scalar_select %p231, %s230, 1
          %s233 = scalar_lea.vmem %s4, %s232
          %s234 = smul.u32 2, %s29
        $region28: #{tpu_custom_call.1} parent=11 // pred_fallthru
          _
      $region12: #{tpu_custom_call.1} parent=5 // pred_fallthru
        _
      %p235 = scmp.lt.s32.totalorder %s19, 2
      // Predicated region
      $region29: #{tpu_custom_call.1} parent=5 // pred_check
        %p236 = pneg %p235
      $region30: #{tpu_custom_call.1} parent=5 // pred_check_branch
        %238 = sbr.rel (%p236) target = $region32
      $region31: #{tpu_custom_call.1} parent=5 // pred_region
        // Predicated region
        $region33: #{tpu_custom_call.1} parent=31 // pred_check
          %p239 = pneg %p53
        $region34: #{tpu_custom_call.1} parent=31 // pred_check_branch
          %241 = sbr.rel (%p239) target = $region36
        $region35: #{tpu_custom_call.1} parent=31 // pred_region
          %s242 = sand.u32 %s43, 1
          %s243 = scalar_lea.sflag [#allocation3], %s242
          %s244 = sand.u32 %s43, 1
          %s245 = smul.addr %s244, 16
          %s246 = scalar_lea.vmem [#allocation2], %s245
          %s247 = smul.u32 2, %s27
          %249 = vsyncadd %s243, 0
          %s250 = smul.addr %s26, 2
          %s251 = sadd.s32 %s247, %s250
          %s252 = smul.addr %s251, 8
          %s253 = scalar_lea.hbm %s0, %s252
          %s255 = sshll.u32 %s253, 4
          %s256 = int_to_ptr.hbm [resolvable:$true] %s255
          %s257 = sshll.u32 %s246, 4
          %s258 = int_to_ptr.vmem [resolvable:$true] %s257
          %260 = dma.hbm_to_vmem [thread:$0]  %s256, 256, %s258, %s243
        $region36: #{tpu_custom_call.1} parent=31 // pred_fallthru
          _
      $region32: #{tpu_custom_call.1} parent=5 // pred_fallthru
        _
      %p261 = scmp.le.s32.totalorder 1, %s19
      %p262 = scmp.lt.s32.totalorder %s19, 3
      %p263 = pnand %p261, %p262
      %p264 = pneg %p263
      // Predicated region
      $region37: #{tpu_custom_call.1} parent=5 // pred_check
        _
      $region38: #{tpu_custom_call.1} parent=5 // pred_check_branch
        %266 = sbr.rel (%p263) target = $region40
      $region39: #{tpu_custom_call.1} parent=5 // pred_region
        %s267 = ssub.s32 %s19, 1
        %s268 = sand.u32 %s46, 1
        %s269 = scalar_lea.sflag [#allocation3], %s268
        %s270 = sand.u32 %s46, 1
        %s271 = smul.addr %s270, 16
        %s272 = scalar_lea.vmem [#allocation2], %s271
        // Predicated region
        $region41: #{tpu_custom_call.1} parent=39 // pred_check
          %p273 = pneg %p59
        $region42: #{tpu_custom_call.1} parent=39 // pred_check_branch
          %275 = sbr.rel (%p273) target = $region44
        $region43: #{tpu_custom_call.1} parent=39 // pred_region
          %277 = dma.done %s269, 256
        $region44: #{tpu_custom_call.1} parent=39 // pred_fallthru
          _
        // Predicated region
        $region45: #{tpu_custom_call.1} parent=39 // pred_check
          %p278 = pneg %p80
        $region46: #{tpu_custom_call.1} parent=39 // pred_check_branch
          %280 = sbr.rel (%p278) target = $region48
        $region47: #{tpu_custom_call.1} parent=39 // pred_region
          %282 = dma.done [#allocation6], 128
        $region48: #{tpu_custom_call.1} parent=39 // pred_fallthru
          _
        // Predicated region
        $region49: #{tpu_custom_call.1} parent=39 // pred_check
          %p283 = pneg %p101
        $region50: #{tpu_custom_call.1} parent=39 // pred_check_branch
          %285 = sbr.rel (%p283) target = $region52
        $region51: #{tpu_custom_call.1} parent=39 // pred_region
          %287 = dma.done [#allocation6], 128
        $region52: #{tpu_custom_call.1} parent=39 // pred_fallthru
          _
        // Predicated region
        $region53: #{tpu_custom_call.1} parent=39 // pred_check
          %p288 = pneg %p122
        $region54: #{tpu_custom_call.1} parent=39 // pred_check_branch
          %290 = sbr.rel (%p288) target = $region56
        $region55: #{tpu_custom_call.1} parent=39 // pred_region
          %292 = dma.done [#allocation9], 128
        $region56: #{tpu_custom_call.1} parent=39 // pred_fallthru
          _
        %s293 = sand.u32 %s46, 1
        %s294 = scalar_lea.sflag [#allocation3], %s293
        %s295 = sand.u32 %s46, 1
        %s296 = smul.addr %s295, 16
        %s297 = scalar_lea.vmem [#allocation2], %s296
        %p298 = pneg %p59
        %p299 = pneg %p56
        %p300 = pneg %p80
        %p301 = pneg %p77
        %p302 = pneg %p101
        %p303 = pneg %p98
        %p304 = pneg %p122
        %p305 = pneg %p119
        %s306 = smul.u32 2, %s29
        %p307 = scmp.lt.s32.totalorder %s306, 1
        %s308 = scalar_select %p307, %s306, 1
        %s309 = scalar_lea.vmem %s4, %s308
        %p310 = pneg %p148
        %p311 = pneg %p145
        %p312 = pneg %p176
        %p313 = pneg %p173
        %s314 = sand.u32 %s163, 1
        %s315 = scalar_lea.sflag [#allocation4], %s314
        %s316 = sand.u32 %s163, 1
        %s317 = smul.addr %s316, 16
        %s318 = scalar_lea.vmem [#allocation10], %s317
        %s319 = smul.u32 2, %s29
        %s320 = smul.u32 2, %s29
        %p321 = scmp.lt.s32.totalorder %s320, 1
        %s322 = scalar_select %p321, %s320, 1
        %s323 = scalar_lea.vmem %s4, %s322
        %s324 = smul.u32 2, %s29
        %s325 = smul.u32 2, %s29
        %v326 = vld [vmem:[%s272] sm:$0xff]
        %v327 = vld [vmem:[%s272 + $0x8] sm:$0xff]
        %v328 = vld [vmem:[%s323] sm:$0x3]
        %v329 = vld [vmem:[#allocation5] sm:$0xff]
        %vm330 = vcmask 64512
        %v332 = vsel %vm330, %v329, 0
        %334 = vmatpush.msra.mxu0 0.0
        %335 = vmatpush.msra.mxu0 0.0
        %336 = vmatpush.msra.mxu0 0.0
        %337 = vmatpush.msra.mxu0 0.0
        %338 = vmatpush.msra.mxu0 0.0
        %339 = vmatpush.msra.mxu0 0.0
        %340 = vmatpush.msra.mxu0 0.0
        %341 = vmatpush.msra.mxu0 0.0
        %342 = vmatpush.msra.mxu0 0.0
        %343 = vmatpush.msra.mxu0 0.0
        %344 = vmatpush.msra.mxu0 0.0
        %345 = vmatpush.msra.mxu0 0.0
        %346 = vmatpush.msra.mxu0 0.0
        %347 = vmatpush.msra.mxu0 0.0
        %348 = vmatpush.msra.mxu0 0.0
        %349 = vmatpush.msra.mxu0 %v326
        %350 = vmatmul.f32.gmra.mxu0 %v332
        %v351 = vpop.f32.mrf.mxu0
        %v352 = vadd.f32 0.0, %v351
        %353 = vdwg.mxu0
        %354 = vmatpush.msra.mxu0 0.0
        %355 = vmatpush.msra.mxu0 0.0
        %356 = vmatpush.msra.mxu0 0.0
        %357 = vmatpush.msra.mxu0 0.0
        %358 = vmatpush.msra.mxu0 0.0
        %359 = vmatpush.msra.mxu0 0.0
        %360 = vmatpush.msra.mxu0 0.0
        %361 = vmatpush.msra.mxu0 0.0
        %362 = vmatpush.msra.mxu0 0.0
        %363 = vmatpush.msra.mxu0 0.0
        %364 = vmatpush.msra.mxu0 0.0
        %365 = vmatpush.msra.mxu0 0.0
        %366 = vmatpush.msra.mxu0 0.0
        %367 = vmatpush.msra.mxu0 0.0
        %368 = vmatpush.msra.mxu0 0.0
        %369 = vmatpush.msra.mxu0 %v327
        %370 = vmatmul.f32.gmra.mxu0 %v332
        %v371 = vpop.f32.mrf.mxu0
        %v372 = vadd.f32 0.0, %v371
        %373 = vdwg.mxu0
        %v374 = vmul.f32 %v352, 0.1
        %v375 = vmul.f32 %v372, 0.1
        %v376 = vmax.f32 %v352, %v374
        %v377 = vmax.f32 %v372, %v375
        %v378 = vld [vmem:[#allocation7] sm:$0xff]
        %v380 = vsel %vm330, %v378, 0
        %382 = vmatpush.msra.mxu0 0.0
        %383 = vmatpush.msra.mxu0 0.0
        %384 = vmatpush.msra.mxu0 0.0
        %385 = vmatpush.msra.mxu0 0.0
        %386 = vmatpush.msra.mxu0 0.0
        %387 = vmatpush.msra.mxu0 0.0
        %388 = vmatpush.msra.mxu0 0.0
        %389 = vmatpush.msra.mxu0 0.0
        %390 = vmatpush.msra.mxu0 0.0
        %391 = vmatpush.msra.mxu0 0.0
        %392 = vmatpush.msra.mxu0 0.0
        %393 = vmatpush.msra.mxu0 0.0
        %394 = vmatpush.msra.mxu0 0.0
        %395 = vmatpush.msra.mxu0 0.0
        %396 = vmatpush.msra.mxu0 0.0
        %397 = vmatpush.msra.mxu0 %v376
        %398 = vmatmul.f32.gmra.mxu0 %v380
        %v399 = vpop.f32.mrf.mxu0
        %v400 = vadd.f32 0.0, %v399
        %401 = vdwg.mxu0
        %402 = vmatpush.msra.mxu0 0.0
        %403 = vmatpush.msra.mxu0 0.0
        %404 = vmatpush.msra.mxu0 0.0
        %405 = vmatpush.msra.mxu0 0.0
        %406 = vmatpush.msra.mxu0 0.0
        %407 = vmatpush.msra.mxu0 0.0
        %408 = vmatpush.msra.mxu0 0.0
        %409 = vmatpush.msra.mxu0 0.0
        %410 = vmatpush.msra.mxu0 0.0
        %411 = vmatpush.msra.mxu0 0.0
        %412 = vmatpush.msra.mxu0 0.0
        %413 = vmatpush.msra.mxu0 0.0
        %414 = vmatpush.msra.mxu0 0.0
        %415 = vmatpush.msra.mxu0 0.0
        %416 = vmatpush.msra.mxu0 0.0
        %417 = vmatpush.msra.mxu0 %v377
        %418 = vmatmul.f32.gmra.mxu0 %v380
        %v419 = vpop.f32.mrf.mxu0
        %v420 = vadd.f32 0.0, %v419
        %421 = vdwg.mxu0
        %v423 = vperm.slane %v328, 0
        %v424 = vperm.slane %v328, 1
        %v427 = vmul.f32 %v400, %v423
        %v428 = vmul.f32 %v420, %v424
        %v429 = vld [vmem:[#allocation8] sm:$0xff]
        %v431 = vsel %vm330, %v429, 0
        %433 = vmatpush.msra.mxu0 0.0
        %434 = vmatpush.msra.mxu0 0.0
        %435 = vmatpush.msra.mxu0 0.0
        %436 = vmatpush.msra.mxu0 0.0
        %437 = vmatpush.msra.mxu0 0.0
        %438 = vmatpush.msra.mxu0 0.0
        %439 = vmatpush.msra.mxu0 0.0
        %440 = vmatpush.msra.mxu0 0.0
        %441 = vmatpush.msra.mxu0 0.0
        %442 = vmatpush.msra.mxu0 0.0
        %443 = vmatpush.msra.mxu0 0.0
        %444 = vmatpush.msra.mxu0 0.0
        %445 = vmatpush.msra.mxu0 0.0
        %446 = vmatpush.msra.mxu0 0.0
        %447 = vmatpush.msra.mxu0 0.0
        %448 = vmatpush.msra.mxu0 %v376
        %449 = vmatmul.f32.gmra.mxu0 %v431
        %v450 = vpop.f32.mrf.mxu0
        %v451 = vadd.f32 0.0, %v450
        %452 = vdwg.mxu0
        %453 = vmatpush.msra.mxu0 0.0
        %454 = vmatpush.msra.mxu0 0.0
        %455 = vmatpush.msra.mxu0 0.0
        %456 = vmatpush.msra.mxu0 0.0
        %457 = vmatpush.msra.mxu0 0.0
        %458 = vmatpush.msra.mxu0 0.0
        %459 = vmatpush.msra.mxu0 0.0
        %460 = vmatpush.msra.mxu0 0.0
        %461 = vmatpush.msra.mxu0 0.0
        %462 = vmatpush.msra.mxu0 0.0
        %463 = vmatpush.msra.mxu0 0.0
        %464 = vmatpush.msra.mxu0 0.0
        %465 = vmatpush.msra.mxu0 0.0
        %466 = vmatpush.msra.mxu0 0.0
        %467 = vmatpush.msra.mxu0 0.0
        %468 = vmatpush.msra.mxu0 %v377
        %469 = vmatmul.f32.gmra.mxu0 %v431
        %v470 = vpop.f32.mrf.mxu0
        %v471 = vadd.f32 0.0, %v470
        %472 = vdwg.mxu0
        %v473 = vmul.f32 %v451, %v423
        %v474 = vmul.f32 %v471, %v424
        %v475 = vlaneseq
        %v476 = vshrl.u32 %v475, 7
        %vm477 = vcmp.ge.s32.totalorder %v476, 4
        %v478 = vsel %vm477, 1.5707964, 0.0
        %v479 = vsub.f32 %v473, %v478
        %v480 = vsub.f32 %v474, %v478
        %v481 = vand.u32 2147483647, %v479
        %vm482 = vcmp.le.f32.partialorder %v481, 0.7853982
        %vm483 = vcmp.lt.s32.totalorder %v479, 0
        %v484 = vand.u32 %v479, 2139095040
        %v485 = vshrl.u32 %v484, 23
        %v486 = vsub.s32 %v485, 127
        %v487 = vand.u32 2147483647, %v479
        %v488 = vand.u32 %v487, 8388607
        %v489 = vor.u32 %v488, 8388608
        %v490 = vsub.s32 0, %v489
        %v491 = vadd.s32 %v486, 1
        %vm492 = vcmp.gt.s32.totalorder %v491, 0
        %v493 = vsel %vm492, %v491, 0
        %v494 = vshrl.u32 %v493, 5
        %v495 = vand.u32 %v493, 31
        %v496 = vsub.s32 32, %v495
        %v497 = vshrl.u32 683565275, %v496
        %v498 = vshll.u32 683565275, %v495
        %v499 = vshrl.u32 2475754826, %v496
        %v500 = vor.u32 %v498, %v499
        %v501 = vshll.u32 2475754826, %v495
        %v502 = vshrl.u32 2131351028, %v496
        %v503 = vor.u32 %v501, %v502
        %v504 = vshll.u32 2131351028, %v495
        %v505 = vshrl.u32 2102212464, %v496
        %v506 = vor.u32 %v504, %v505
        %v507 = vshll.u32 2102212464, %v495
        %v508 = vshrl.u32 920167782, %v496
        %v509 = vor.u32 %v507, %v508
        %v510 = vshll.u32 920167782, %v495
        %v511 = vshrl.u32 1326507024, %v496
        %v512 = vor.u32 %v510, %v511
        %vm513 = vcmp.lt.s32.totalorder %v494, 1
        %vm514 = vcmp.lt.s32.totalorder %v494, 2
        %vm515 = vcmp.lt.s32.totalorder %v494, 3
        %vm516 = vcmp.lt.s32.totalorder %v494, 4
        %v517 = vsel %vm513, %v497, %v500
        %v518 = vsel %vm516, %v506, 2102212464
        %v519 = vsel %vm515, %v503, %v518
        %v520 = vsel %vm514, %v517, %v519
        %v521 = vsel %vm513, %v500, %v503
        %v522 = vsel %vm516, %v509, 920167782
        %v523 = vsel %vm515, %v506, %v522
        %v524 = vsel %vm514, %v521, %v523
        %v525 = vsel %vm513, %v503, %v506
        %v526 = vsel %vm516, %v512, 1326507024
        %v527 = vsel %vm515, %v509, %v526
        %v528 = vsel %vm514, %v525, %v527
        %v529 = vshll.u32 %v489, 8
        %v530 = vand.u32 %v529, 65535
        %v531 = vshrl.u32 %v529, 16
        %v532 = vand.u32 %v528, 65535
        %v533 = vshrl.u32 %v528, 16
        %v534 = vmul.u32 %v530, %v532
        %v535 = vmul.u32 %v530, %v533
        %v536 = vmul.u32 %v531, %v532
        %v537 = vmul.u32 %v531, %v533
        %v538 = vshll.u32 %v535, 16
        %v539 = vshrl.u32 %v535, 16
        %v540 = vshll.u32 %v536, 16
        %v541 = vshrl.u32 %v536, 16
        %vm542 = vc.u32 %v534, %v538
        %v543 = vsel %vm542, 1, 0
        %v544 = vadd.s32 %v534, %v538
        %v545 = vadd.s32 %v537, %v543
        %vm546 = vc.u32 %v544, %v540
        %v547 = vsel %vm546, 1, 0
        %v548 = vadd.s32 %v544, %v540
        %v549 = vadd.s32 %v545, %v547
        %v550 = vadd.s32 %v549, %v539
        %v551 = vadd.s32 %v550, %v541
        %v552 = vand.u32 %v529, 65535
        %v553 = vshrl.u32 %v529, 16
        %v554 = vand.u32 %v524, 65535
        %v555 = vshrl.u32 %v524, 16
        %v556 = vmul.u32 %v552, %v554
        %v557 = vmul.u32 %v552, %v555
        %v558 = vmul.u32 %v553, %v554
        %v559 = vmul.u32 %v553, %v555
        %v560 = vshll.u32 %v557, 16
        %v561 = vshrl.u32 %v557, 16
        %v562 = vshll.u32 %v558, 16
        %v563 = vshrl.u32 %v558, 16
        %vm564 = vc.u32 %v556, %v560
        %v565 = vsel %vm564, 1, 0
        %v566 = vadd.s32 %v556, %v560
        %v567 = vadd.s32 %v559, %v565
        %vm568 = vc.u32 %v566, %v562
        %v569 = vsel %vm568, 1, 0
        %v570 = vadd.s32 %v566, %v562
        %v571 = vadd.s32 %v567, %v569
        %v572 = vadd.s32 %v571, %v561
        %v573 = vadd.s32 %v572, %v563
        %v574 = vmul.u32 %v529, %v520
        %v575 = vadd.s32 %v551, %v570
        %vm576 = vc.u32 %v551, %v570
        %v577 = vadd.s32 %v573, 1
        %v578 = vsel %vm576, %v577, %v573
        %v579 = vadd.s32 %v574, %v578
        %v580 = vadd.s32 %v579, 536870912
        %v581 = vshrl.u32 %v580, 30
        %v582 = vshll.u32 %v581, 30
        %v583 = vsub.s32 %v579, %v582
        %vm584 = vcmp.lt.s32.totalorder %v583, 0
        %v585 = vsub.s32 0, %v583
        %v586 = vsel %vm584, %v585, %v583
        %v587 = vclz %v586
        %v588 = vsub.s32 %v587, 2
        %vm589 = vcmp.gt.s32.totalorder 0, %v588
        %v590 = vsel %vm589, 0, %v588
        %v591 = vsub.s32 32, %v590
        %v592 = vshll.u32 %v583, %v590
        %v593 = vshrl.u32 %v575, %v591
        %v594 = vor.u32 %v592, %v593
        %v595 = vsub.s32 4294967266, %v590
        %v596 = vadd.s32 %v595, 127
        %v597 = vshll.u32 %v596, 23
        %v598 = vor.u32 4788187, %v597
        %v599 = vand.u32 2147483647, %v598
        %v601 = vcvt.s32.f32 %v594
        %v602 = vmul.f32 %v601, %v599
        %v603 = vxor.u32 %v602, 2147483648
        %v604 = vsel %vm483, %v603, %v602
        %v605 = vsub.s32 4, %v581
        %v606 = vsel %vm483, %v605, %v581
        %v607 = vsel %vm482, %v479, %v604
        %v608 = vsel %vm482, 0, %v606
        %v609 = vmul.f32 %v607, %v607
        %v610 = vmul.f32 %v609, -0.001358992
        %v611 = vadd.f32 %v610, 0.041655596
        %v612 = vmul.f32 %v609, %v611
        %v613 = vadd.f32 %v612, -0.4999988
        %v614 = vmul.f32 %v609, %v613
        %v615 = vadd.f32 1.0, %v614
        %v616 = vmul.f32 %v607, %v607
        %v617 = vmul.f32 %v616, -0.00019511016
        %v618 = vadd.f32 %v617, 0.008332121
        %v619 = vmul.f32 %v616, %v618
        %v620 = vadd.f32 %v619, -0.16666654
        %v621 = vmul.f32 %v616, %v620
        %v622 = vadd.f32 %v621, 1.0
        %v623 = vmul.f32 %v622, %v607
        %vm624 = vweird.f32 %v479
        %v625 = vand.u32 %v608, 3
        %vm626 = vcmp.lt.s32.totalorder %v625, 2
        %vm627 = vcmp.eq.s32.totalorder %v625, 0
        %v628 = vxor.u32 %v623, 2147483648
        %v629 = vsel %vm627, %v615, %v628
        %vm630 = vcmp.eq.s32.totalorder %v625, 2
        %v631 = vxor.u32 %v615, 2147483648
        %v632 = vsel %vm630, %v631, %v623
        %v633 = vsel %vm626, %v629, %v632
        %v634 = vsel %vm624, nan, %v633
        %v635 = vand.u32 2147483647, %v480
        %vm636 = vcmp.le.f32.partialorder %v635, 0.7853982
        %vm637 = vcmp.lt.s32.totalorder %v480, 0
        %v638 = vand.u32 %v480, 2139095040
        %v639 = vshrl.u32 %v638, 23
        %v640 = vsub.s32 %v639, 127
        %v641 = vand.u32 2147483647, %v480
        %v642 = vand.u32 %v641, 8388607
        %v643 = vor.u32 %v642, 8388608
        %v644 = vsub.s32 0, %v643
        %v645 = vadd.s32 %v640, 1
        %vm646 = vcmp.gt.s32.totalorder %v645, 0
        %v647 = vsel %vm646, %v645, 0
        %v648 = vshrl.u32 %v647, 5
        %v649 = vand.u32 %v647, 31
        %v650 = vsub.s32 32, %v649
        %v651 = vshrl.u32 683565275, %v650
        %v652 = vshll.u32 683565275, %v649
        %v653 = vshrl.u32 2475754826, %v650
        %v654 = vor.u32 %v652, %v653
        %v655 = vshll.u32 2475754826, %v649
        %v656 = vshrl.u32 2131351028, %v650
        %v657 = vor.u32 %v655, %v656
        %v658 = vshll.u32 2131351028, %v649
        %v659 = vshrl.u32 2102212464, %v650
        %v660 = vor.u32 %v658, %v659
        %v661 = vshll.u32 2102212464, %v649
        %v662 = vshrl.u32 920167782, %v650
        %v663 = vor.u32 %v661, %v662
        %v664 = vshll.u32 920167782, %v649
        %v665 = vshrl.u32 1326507024, %v650
        %v666 = vor.u32 %v664, %v665
        %vm667 = vcmp.lt.s32.totalorder %v648, 1
        %vm668 = vcmp.lt.s32.totalorder %v648, 2
        %vm669 = vcmp.lt.s32.totalorder %v648, 3
        %vm670 = vcmp.lt.s32.totalorder %v648, 4
        %v671 = vsel %vm667, %v651, %v654
        %v672 = vsel %vm670, %v660, 2102212464
        %v673 = vsel %vm669, %v657, %v672
        %v674 = vsel %vm668, %v671, %v673
        %v675 = vsel %vm667, %v654, %v657
        %v676 = vsel %vm670, %v663, 920167782
        %v677 = vsel %vm669, %v660, %v676
        %v678 = vsel %vm668, %v675, %v677
        %v679 = vsel %vm667, %v657, %v660
        %v680 = vsel %vm670, %v666, 1326507024
        %v681 = vsel %vm669, %v663, %v680
        %v682 = vsel %vm668, %v679, %v681
        %v683 = vshll.u32 %v643, 8
        %v684 = vand.u32 %v683, 65535
        %v685 = vshrl.u32 %v683, 16
        %v686 = vand.u32 %v682, 65535
        %v687 = vshrl.u32 %v682, 16
        %v688 = vmul.u32 %v684, %v686
        %v689 = vmul.u32 %v684, %v687
        %v690 = vmul.u32 %v685, %v686
        %v691 = vmul.u32 %v685, %v687
        %v692 = vshll.u32 %v689, 16
        %v693 = vshrl.u32 %v689, 16
        %v694 = vshll.u32 %v690, 16
        %v695 = vshrl.u32 %v690, 16
        %vm696 = vc.u32 %v688, %v692
        %v697 = vsel %vm696, 1, 0
        %v698 = vadd.s32 %v688, %v692
        %v699 = vadd.s32 %v691, %v697
        %vm700 = vc.u32 %v698, %v694
        %v701 = vsel %vm700, 1, 0
        %v702 = vadd.s32 %v698, %v694
        %v703 = vadd.s32 %v699, %v701
        %v704 = vadd.s32 %v703, %v693
        %v705 = vadd.s32 %v704, %v695
        %v706 = vand.u32 %v683, 65535
        %v707 = vshrl.u32 %v683, 16
        %v708 = vand.u32 %v678, 65535
        %v709 = vshrl.u32 %v678, 16
        %v710 = vmul.u32 %v706, %v708
        %v711 = vmul.u32 %v706, %v709
        %v712 = vmul.u32 %v707, %v708
        %v713 = vmul.u32 %v707, %v709
        %v714 = vshll.u32 %v711, 16
        %v715 = vshrl.u32 %v711, 16
        %v716 = vshll.u32 %v712, 16
        %v717 = vshrl.u32 %v712, 16
        %vm718 = vc.u32 %v710, %v714
        %v719 = vsel %vm718, 1, 0
        %v720 = vadd.s32 %v710, %v714
        %v721 = vadd.s32 %v713, %v719
        %vm722 = vc.u32 %v720, %v716
        %v723 = vsel %vm722, 1, 0
        %v724 = vadd.s32 %v720, %v716
        %v725 = vadd.s32 %v721, %v723
        %v726 = vadd.s32 %v725, %v715
        %v727 = vadd.s32 %v726, %v717
        %v728 = vmul.u32 %v683, %v674
        %v729 = vadd.s32 %v705, %v724
        %vm730 = vc.u32 %v705, %v724
        %v731 = vadd.s32 %v727, 1
        %v732 = vsel %vm730, %v731, %v727
        %v733 = vadd.s32 %v728, %v732
        %v734 = vadd.s32 %v733, 536870912
        %v735 = vshrl.u32 %v734, 30
        %v736 = vshll.u32 %v735, 30
        %v737 = vsub.s32 %v733, %v736
        %vm738 = vcmp.lt.s32.totalorder %v737, 0
        %v739 = vsub.s32 0, %v737
        %v740 = vsel %vm738, %v739, %v737
        %v741 = vclz %v740
        %v742 = vsub.s32 %v741, 2
        %vm743 = vcmp.gt.s32.totalorder 0, %v742
        %v744 = vsel %vm743, 0, %v742
        %v745 = vsub.s32 32, %v744
        %v746 = vshll.u32 %v737, %v744
        %v747 = vshrl.u32 %v729, %v745
        %v748 = vor.u32 %v746, %v747
        %v749 = vsub.s32 4294967266, %v744
        %v750 = vadd.s32 %v749, 127
        %v751 = vshll.u32 %v750, 23
        %v752 = vor.u32 4788187, %v751
        %v753 = vand.u32 2147483647, %v752
        %v755 = vcvt.s32.f32 %v748
        %v756 = vmul.f32 %v755, %v753
        %v757 = vxor.u32 %v756, 2147483648
        %v758 = vsel %vm637, %v757, %v756
        %v759 = vsub.s32 4, %v735
        %v760 = vsel %vm637, %v759, %v735
        %v761 = vsel %vm636, %v480, %v758
        %v762 = vsel %vm636, 0, %v760
        %v763 = vmul.f32 %v761, %v761
        %v764 = vmul.f32 %v763, -0.001358992
        %v765 = vadd.f32 %v764, 0.041655596
        %v766 = vmul.f32 %v763, %v765
        %v767 = vadd.f32 %v766, -0.4999988
        %v768 = vmul.f32 %v763, %v767
        %v769 = vadd.f32 1.0, %v768
        %v770 = vmul.f32 %v761, %v761
        %v771 = vmul.f32 %v770, -0.00019511016
        %v772 = vadd.f32 %v771, 0.008332121
        %v773 = vmul.f32 %v770, %v772
        %v774 = vadd.f32 %v773, -0.16666654
        %v775 = vmul.f32 %v770, %v774
        %v776 = vadd.f32 %v775, 1.0
        %v777 = vmul.f32 %v776, %v761
        %vm778 = vweird.f32 %v480
        %v779 = vand.u32 %v762, 3
        %vm780 = vcmp.lt.s32.totalorder %v779, 2
        %vm781 = vcmp.eq.s32.totalorder %v779, 0
        %v782 = vxor.u32 %v777, 2147483648
        %v783 = vsel %vm781, %v769, %v782
        %vm784 = vcmp.eq.s32.totalorder %v779, 2
        %v785 = vxor.u32 %v769, 2147483648
        %v786 = vsel %vm784, %v785, %v777
        %v787 = vsel %vm780, %v783, %v786
        %v788 = vsel %vm778, nan, %v787
        %v789 = vmul.f32 %v427, %v634
        %v790 = vmul.f32 %v428, %v788
        %791 = vst [vmem:[%s318] sm:$0xff] %v789
        %792 = vst [vmem:[%s318 + $0x8] sm:$0xff] %v790
        %s793 = sand.u32 %s163, 1
        %s794 = scalar_lea.sflag [#allocation4], %s793
        %s795 = sand.u32 %s163, 1
        %s796 = smul.addr %s795, 16
        %s797 = scalar_lea.vmem [#allocation10], %s796
        // Predicated region
        $region57: #{tpu_custom_call.1} parent=39 // pred_check
          %p798 = pneg %p173
        $region58: #{tpu_custom_call.1} parent=39 // pred_check_branch
          %800 = sbr.rel (%p798) target = $region60
        $region59: #{tpu_custom_call.1} parent=39 // pred_region
          %s801 = smul.u32 2, %s29
          %803 = vsyncadd %s794, 0
          %s804 = smul.addr %s28, 2
          %s805 = sadd.s32 %s801, %s804
          %s806 = smul.addr %s805, 8
          %s807 = scalar_lea.hbm %s5, %s806
          %s809 = sshll.u32 %s797, 4
          %s810 = int_to_ptr.vmem [resolvable:$true] %s809
          %s811 = sshll.u32 %s807, 4
          %s812 = int_to_ptr.hbm [resolvable:$true] %s811
          %814 = dma.vmem_to_hbm [thread:$0]  %s810, 256, %s812, %s794
        $region60: #{tpu_custom_call.1} parent=39 // pred_fallthru
          _
      $region40: #{tpu_custom_call.1} parent=5 // pred_fallthru
        _
      %p815 = scmp.le.s32.totalorder 2, %s19
      // Predicated region
      $region61: #{tpu_custom_call.1} parent=5 // pred_check
        %p816 = pneg %p815
      $region62: #{tpu_custom_call.1} parent=5 // pred_check_branch
        %818 = sbr.rel (%p816) target = $region64
      $region63: #{tpu_custom_call.1} parent=5 // pred_region
        %s819 = ssub.s32 %s19, 2
        // Predicated region
        $region65: #{tpu_custom_call.1} parent=63 // pred_check
          %p820 = pneg %p179
        $region66: #{tpu_custom_call.1} parent=63 // pred_check_branch
          %822 = sbr.rel (%p820) target = $region68
        $region67: #{tpu_custom_call.1} parent=63 // pred_region
          %s823 = sand.u32 %s164, 1
          %s824 = scalar_lea.sflag [#allocation4], %s823
          %s825 = sand.u32 %s164, 1
          %s826 = smul.addr %s825, 16
          %s827 = scalar_lea.vmem [#allocation10], %s826
          %829 = dma.done %s824, 256
        $region68: #{tpu_custom_call.1} parent=63 // pred_fallthru
          _
      $region64: #{tpu_custom_call.1} parent=5 // pred_fallthru
        _
    $region6: #{tpu_custom_call.1} parent=1 // loop_footer
      %s23 = sadd.s32 1, %s19
    $region7: #{tpu_custom_call.1} parent=1 // loop_footer_branch
      %18 = sbr.rel target = $region3
    $region8: #{tpu_custom_call.1} parent=1 // loop_exit
      _
    %830 = vsyncpa [#allocation3], 1
    %s831 = scalar_lea.sflag [#allocation3], 1
    %832 = vsyncpa %s831, 1
    %833 = vsyncpa [#allocation6], 1
    %834 = vsyncpa [#allocation9], 1
    %835 = vsyncpa [#allocation4], 1
    %s836 = scalar_lea.sflag [#allocation4], 1
    %837 = vsyncpa %s836, 1

</llo_original>
